<compile_context>
chip_gen: v6e
topology: v6e:2x2x1
jax: 0.10.0
libtpu: 0.0.40
codegen_flags: <defaults>
</compile_context>

<pallas_src>
import jax
import jax.numpy as jnp
from jax import lax
from jax.experimental import pallas as pl
from jax.experimental.pallas import tpu as pltpu

# ----------------------------------------------------------------------------
# Module "parameters" (from __init__).
# ----------------------------------------------------------------------------
RADIUS = 2
SIZE = 2 * RADIUS + 1
TOLERANCE = 0.3          # wand_tolerance
EPS = 1e-6
CHANNELS = 3
# gauss_sigma / gaussian_conv are built in __init__ but never used in forward.

# Static disk offsets — only used by the pure-JAX reference for the self-check.
_DISK_OFFSETS = [
    (i, j)
    for i in range(SIZE)
    for j in range(SIZE)
    if (i - RADIUS) ** 2 + (j - RADIUS) ** 2 <= RADIUS ** 2
]


# ----------------------------------------------------------------------------
# Dark-area mask (corner flood fill) — sequential / data-dependent, plain JAX.
# ----------------------------------------------------------------------------
def compute_dark_area_mask(images, tolerance):
    """Flood fill from the four corners, constrained to pixels whose color is
    within `tolerance` of the (0, 0) color.  images: (N, 3, H, W) -> (N,1,H,W).

    TODO(synk): the stack-based flood fill has no clean Pallas equivalent; it
    is implemented here (outside the kernel) as the fixpoint of directional
    masked sweeps (row/column run propagation), which is equivalent.
    """
    N, C, H, W = images.shape
    start_color = images[:, :, 0, 0]                                   # (N, C)
    # Squared-distance compare (drops the full-image sqrt pass).
    dist2 = jnp.sum((images - start_color[:, :, None, None]) ** 2, axis=1)
    allowed = dist2 <= (tolerance * tolerance)                         # (N, H, W)

    seeds = jnp.zeros((N, H, W), dtype=bool)
    for (x, y) in ((0, 0), (H - 1, 0), (H - 1, W - 1), (0, W - 1)):
        seeds = seeds.at[:, x, y].set(True)
    seeds = seeds & allowed

    blocked = (~allowed).astype(jnp.int32)

    def sweep(filled, axis, reverse):
        # Propagate `filled` through contiguous `allowed` runs along `axis`.
        seg = lax.cumsum(blocked, axis=axis, reverse=reverse)          # run id
        reach = lax.cummax(jnp.where(filled, seg, -1), axis=axis, reverse=reverse)
        return filled | (allowed & (reach == seg))

    def body(state):
        f, _ = state
        f0 = f
        f = sweep(f, 2, False)
        f = sweep(f, 2, True)
        f = sweep(f, 1, False)
        f = sweep(f, 1, True)
        return f, jnp.any(f != f0)

    filled, _ = lax.while_loop(lambda s: s[1], body, (seeds, jnp.array(True)))
    return filled.astype(jnp.float32)[:, None, :, :]


# ----------------------------------------------------------------------------
# Pallas kernel: radius-2 disk conv (row-run decomposition with pltpu.roll)
# plus all the elementwise normalization / masking / division / clamping math.
# ----------------------------------------------------------------------------
def _make_spreader_kernel(img_width, eps):
    """Kernel for one grid step.

    Refs (after any squeezed batch dim):
      img_ref  : (C, H, L) raw images in [-1, 1].  L is either W (natural
                 layout) or NB*W (batch lane-packed, each image owns W lanes).
      mask_ref : (H, L) known-pixel mask.
      dark_ref : (H, L) dark-area (flood-fill) mask.
      out_ref  : (C, H, L) result in [-1, 1].
    """

    def kernel(img_ref, mask_ref, dark_ref, out_ref):
        C, H, L = img_ref.shape

        mask = mask_ref[...]                          # (H, L)
        dark = dark_ref[...]
        mask_inv = 1.0 - mask
        blur_mask = jnp.maximum(mask_inv - dark, 0.0)

        # --- constant boundary masks, derived from tiny probe tiles ---------
        # Validity of each rolled contribution is derived from rolled index
        # probes (so the kernel does not depend on the rotate-direction
        # convention of pltpu.roll).  Lane validity only depends on the lane
        # index and row validity only on the row index, so the probes are a
        # single (8, L) sublane tile and a single (H, 128) lane tile instead
        # of full (H, L) planes; only the final broadcasts touch (H, L).
        inv_w = 1.0 / float(img_width)
        lane_f = lax.broadcasted_iota(jnp.int32, (8, L), 1).astype(jnp.float32)
        img_id = jnp.floor((lane_f + 0.5) * inv_w)    # which packed image a lane belongs to
        row_f = lax.broadcasted_iota(jnp.int32, (H, 128), 0).astype(jnp.float32)

        def lane_mask(shift):
            s_eff = float(min(shift, L - shift))
            src = pltpu.roll(lane_f, shift, axis=1)
            ok = ((jnp.floor((src + 0.5) * inv_w) == img_id)
                  & (jnp.abs(src - lane_f) == s_eff))
            return jnp.broadcast_to(ok.astype(jnp.float32)[0:1, :], (H, L))

        def row_mask(shift):
            s_eff = float(min(shift, H - shift))
            src = pltpu.roll(row_f, shift, axis=0)
            ok = jnp.abs(src - row_f) == s_eff
            return jnp.broadcast_to(ok.astype(jnp.float32)[:, 0:1], (H, L))

        lm_p1 = lane_mask(1)
        lm_m1 = lane_mask(L - 1)
        lm_p2 = lane_mask(2)
        lm_m2 = lane_mask(L - 2)
        rm_p1 = row_mask(1)
        rm_m1 = row_mask(H - 1)
        rm_p2 = row_mask(2)
        rm_m2 = row_mask(H - 2)

        def disk_conv(x):
            # Radius-2 disk depthwise conv with zero ("same") padding via the
            # row-run decomposition: row widths (1, 3, 5, 3, 1).
            h3 = (x
                  + lm_p1 * pltpu.roll(x, 1, axis=1)
                  + lm_m1 * pltpu.roll(x, L - 1, axis=1))
            h5 = (h3
                  + lm_p2 * pltpu.roll(x, 2, axis=1)
                  + lm_m2 * pltpu.roll(x, L - 2, axis=1))
            acc = (h5
                   + rm_p1 * pltpu.roll(h3, 1, axis=0)
                   + rm_m1 * pltpu.roll(h3, H - 1, axis=0))
            acc = (acc
                   + rm_p2 * pltpu.roll(x, 2, axis=0)
                   + rm_m2 * pltpu.roll(x, H - 2, axis=0))
            return acc

        mask_blurred = disk_conv(mask_inv)                    # (H, L), exact integer counts
        mask_missed = (mask_blurred < eps).astype(jnp.float32)
        denom = mask_blurred * mask + mask_inv + mask_missed
        inv_denom = pl.reciprocal(denom, approx=True)         # EUP
        inv_denom = inv_denom * (2.0 - denom * inv_denom)     # 1 Newton-Raphson step

        # Affine folding: with y = img + 1 and b = disk_conv(y * blur_mask),
        #   out = clip(b * blur_factor + img * passthru + (passthru - 1), -1, 1)
        # which equals clip(2*(img_blurred*BF + img_norm*PT) - 1, ...) of the
        # original module (disk_conv is linear, so the 0.5 and 2 cancel).
        blur_factor = (mask - mask_missed) * inv_denom * (1.0 - dark)
        passthru = mask_inv + mask_missed
        bias = passthru - 1.0

        for c in range(C):                                    # static unroll (C == 3)
            img_c = img_ref[c]                                # (H, L)
            b = disk_conv((img_c + 1.0) * blur_mask)
            res = b * blur_factor + img_c * passthru + bias
            out_ref[c] = jnp.clip(res, -1.0, 1.0)

    return kernel


# ----------------------------------------------------------------------------
# Generation-aware tiling / VMEM policy.
# ----------------------------------------------------------------------------
def _vmem_capacity_bytes():
    try:
        return int(pltpu.get_tpu_info().vmem_capacity_bytes)
    except Exception:
        return 128 * 1024 * 1024           # v5e/v6e default


def _step_bytes(C, H, L):
    # double-buffered in/out blocks + ~26 live (H, L) f32 temporaries (rough)
    return 4 * H * L * (2 * (C + 2) + 2 * C + 26)


def _pick_batch_group(N, C, H, W, budget_bytes, prefer_multi_step):
    """Largest batch group NB (divisor of N) to pack into the lane axis."""
    divisors = [d for d in range(1, N + 1) if N % d == 0]
    # Multi-step grids need a lane-dense block (last dim % 128 == 0) to keep
    # the BlockSpec legal and the stores unmasked; the whole-array block
    # (d == N) is always a legal block shape.
    legal = [d for d in divisors if (d * W) % 128 == 0 or d == N]
    fits = [d for d in legal if _step_bytes(C, H, d * W) <= budget_bytes]
    if not fits:
        # TODO(synk): add an H-tile grid axis with a 2-row halo so huge images
        # still fit v7x's 64 MiB VMEM; fall back to the smallest legal block.
        return min(legal)
    if prefer_multi_step:
        # v7x-like chips have 2 TensorCores: keep >= 2 (ideally even) grid
        # steps so the "parallel" axis can shard across them.
        for good in (lambda d: N // d >= 2 and (N // d) % 2 == 0,
                     lambda d: N // d >= 2):
            multi = [d for d in fits if good(d)]
            if multi:
                return max(multi)
    return max(fits)                       # biggest tile on 1-TC generations


def uniform_masked_radial_spreader_pallas(images, mask, dark_mask):
    """images: (N, 3, H, W), mask/dark_mask: (N, 1, H, W) -> (N, 3, H, W)."""
    N, C, H, W = images.shape
    assert H >= SIZE and W >= SIZE, "spatial dims must be >= disk size (5)"

    cap = _vmem_capacity_bytes()
    cap_limit = min(int(0.75 * cap), 100 * 1024 * 1024)
    prefer_multi_step = cap <= 96 * 1024 * 1024     # 64 MiB VMEM => v7x-like (2 TCs)

    def compiler_params(est_bytes):
        vmem_limit = int(min(cap_limit, max(32 * 1024 * 1024, (3 * est_bytes) // 2)))
        return pltpu.CompilerParams(
            dimension_semantics=("parallel",),
            vmem_limit_bytes=vmem_limit,
        )

    if W >= 128:
        # Natural-layout path: already lane-dense, so skip the lane-packing
        # relayout transposes entirely (removes ~2x the kernel's own HBM
        # traffic; dominant win on v5e).  One image per grid step.
        # TODO(synk): H-tile with a 2-row halo when a single image exceeds VMEM.
        return pl.pallas_call(
            _make_spreader_kernel(W, EPS),
            out_shape=jax.ShapeDtypeStruct((N, C, H, W), jnp.float32),
            grid_spec=pltpu.PrefetchScalarGridSpec(
                num_scalar_prefetch=0,
                grid=(N,),
                in_specs=[
                    pl.BlockSpec((None, C, H, W), lambda n: (n, 0, 0, 0)),
                    pl.BlockSpec((None, None, H, W), lambda n: (n, 0, 0, 0)),
                    pl.BlockSpec((None, None, H, W), lambda n: (n, 0, 0, 0)),
                ],
                out_specs=pl.BlockSpec((None, C, H, W), lambda n: (n, 0, 0, 0)),
            ),
            compiler_params=compiler_params(_step_bytes(C, H, W)),
        )(images, mask, dark_mask)

    # Lane-packed path (W < 128): pack the batch along the minor (lane) axis
    # so output stores are dense 128-lane rows.  Pick the LARGEST group that
    # fits the VMEM budget (fewest grid steps).
    NB = _pick_batch_group(N, C, H, W, cap_limit, prefer_multi_step)
    G = N // NB
    L = NB * W

    # TODO(synk): replace these XLA relayout passes with in-kernel packing
    # (memory_space=pl.ANY + per-image make_async_copy gathers) to cut the
    # remaining wrapper HBM traffic, mainly for v5e.
    img_t = jnp.transpose(images, (1, 2, 0, 3)).reshape(C, H, N * W)
    mask_t = jnp.transpose(mask[:, 0], (1, 0, 2)).reshape(H, N * W)
    dark_t = jnp.transpose(dark_mask[:, 0], (1, 0, 2)).reshape(H, N * W)

    out = pl.pallas_call(
        _make_spreader_kernel(W, EPS),
        out_shape=jax.ShapeDtypeStruct((C, H, N * W), jnp.float32),
        grid_spec=pltpu.PrefetchScalarGridSpec(
            num_scalar_prefetch=0,
            grid=(G,),
            in_specs=[
                pl.BlockSpec((C, H, L), lambda g: (0, 0, g)),
                pl.BlockSpec((H, L), lambda g: (0, g)),
                pl.BlockSpec((H, L), lambda g: (0, g)),
            ],
            out_specs=pl.BlockSpec((C, H, L), lambda g: (0, 0, g)),
        ),
        compiler_params=compiler_params(_step_bytes(C, H, L)),
    )(img_t, mask_t, dark_t)

    return jnp.transpose(out.reshape(C, H, N, W), (2, 0, 1, 3))


@jax.jit
def forward(batch_images, batch_mask):
    dark_mask = compute_dark_area_mask(batch_images, TOLERANCE)
    return uniform_masked_radial_spreader_pallas(batch_images, batch_mask, dark_mask)


# ----------------------------------------------------------------------------
# Pure-JAX reference (mirrors the PyTorch forward) — used only for self-check.
# ----------------------------------------------------------------------------
@jax.jit
def _reference_forward(images, mask, dark):
    mask_inv = 1.0 - mask
    img_norm = (images + 1.0) * 0.5
    blur_mask = jnp.maximum(mask_inv - dark, 0.0)
    pre_blur = img_norm * blur_mask

    def disk_conv(x):
        H, W = x.shape[-2:]
        xp = jnp.pad(x, ((0, 0), (0, 0), (RADIUS, RADIUS), (RADIUS, RADIUS)))
        out = jnp.zeros_like(x)
        for (di, dj) in _DISK_OFFSETS:
            out = out + xp[:, :, di:di + H, dj:dj + W]
        return out

    mask_blurred = disk_conv(mask_inv)
    img_blurred = disk_conv(pre_blur)
    mask_missed = (mask_blurred < EPS).astype(jnp.float32)
    denom = mask_blurred * mask + mask_inv + mask_missed
    res = (img_blurred * (mask - mask_missed) / denom * (1.0 - dark)
           + img_norm * (mask_inv + mask_missed))
    return jnp.clip(res * 2.0 - 1.0, -1.0, 1.0)


if __name__ == "__main__":
    key = jax.random.PRNGKey(0)
    k1, k2, k3, k4 = jax.random.split(key, 4)

    def run_case(ki, km, N, C, H, W):
        imgs = jax.random.uniform(ki, (N, C, H, W), jnp.float32, -1.0, 1.0)
        m = (jax.random.uniform(km, (N, 1, H, W)) > 0.5).astype(jnp.float32)
        out = jax.block_until_ready(forward(imgs, m))
        assert out.shape == (N, C, H, W) and out.dtype == jnp.float32
        dark = compute_dark_area_mask(imgs, TOLERANCE)
        ref = _reference_forward(imgs, m, dark)
        err = float(jnp.max(jnp.abs(out - ref)))
        assert err < 1e-2, f"kernel/reference mismatch: max abs err = {err}"

    # Lane-packed path: N=8, W=16 packs into a single dense 128-lane block.
    run_case(k1, k2, 8, CHANNELS, 16, 16)
    # Natural-layout path (W >= 128): no wrapper relayout transposes.
    run_case(k3, k4, 2, CHANNELS, 8, 128)

    print("KERNEL_OK")
</pallas_src>

<mosaic_0001>
module attributes {stable_mosaic.version = 11 : i64} {
  func.func @kernel(%arg0: i32, %arg1: memref<3x16x128xf32, #tpu.memory_space<vmem>>, %arg2: memref<16x128xf32, #tpu.memory_space<vmem>>, %arg3: memref<16x128xf32, #tpu.memory_space<vmem>>, %arg4: memref<3x16x128xf32, #tpu.memory_space<vmem>>) attributes {dimension_semantics = [#tpu.dimension_semantics<parallel>], iteration_bounds = array<i64: 1>, scalar_prefetch = 0 : i64, scratch_operands = 0 : i64, tpu.core_type = #tpu.core_type<tc>, window_params = [{transform_indices = @transform_0, window_bounds = array<i64: 3, 16, 128>}, {transform_indices = @transform_1, window_bounds = array<i64: 16, 128>}, {transform_indices = @transform_2, window_bounds = array<i64: 16, 128>}, {transform_indices = @transform_3, window_bounds = array<i64: 3, 16, 128>}]} {
    %c0 = arith.constant 0 : index
    %c0_0 = arith.constant 0 : index
    %0 = vector.load %arg2[%c0, %c0_0] : memref<16x128xf32, #tpu.memory_space<vmem>>, vector<16x128xf32>
    %c0_1 = arith.constant 0 : index
    %c0_2 = arith.constant 0 : index
    %1 = vector.load %arg3[%c0_1, %c0_2] : memref<16x128xf32, #tpu.memory_space<vmem>>, vector<16x128xf32>
    %cst = arith.constant 1.000000e+00 : f32
    %2 = vector.broadcast %cst : f32 to vector<16x128xf32>
    %3 = arith.subf %2, %0 : vector<16x128xf32>
    %4 = arith.subf %3, %1 : vector<16x128xf32>
    %cst_3 = arith.constant 0.000000e+00 : f32
    %5 = vector.broadcast %cst_3 : f32 to vector<16x128xf32>
    %6 = arith.maximumf %4, %5 : vector<16x128xf32>
    %7 = tpu.iota {dimensions = array<i32: 1>} : vector<8x128xi32>
    %8 = arith.sitofp %7 : vector<8x128xi32> to vector<8x128xf32>
    %cst_4 = arith.constant 5.000000e-01 : f32
    %9 = vector.broadcast %cst_4 : f32 to vector<8x128xf32>
    %10 = arith.addf %8, %9 : vector<8x128xf32>
    %cst_5 = arith.constant 6.250000e-02 : f32
    %11 = vector.broadcast %cst_5 : f32 to vector<8x128xf32>
    %12 = arith.mulf %10, %11 : vector<8x128xf32>
    %13 = math.floor %12 : vector<8x128xf32>
    %14 = tpu.iota {dimensions = array<i32: 0>} : vector<16x128xi32>
    %15 = arith.sitofp %14 : vector<16x128xi32> to vector<16x128xf32>
    %c1_i32 = arith.constant 1 : i32
    %16 = tpu.dynamic_rotate %8 by %c1_i32 dim 1 : vector<8x128xf32>, i32 -> vector<8x128xf32>
    %cst_6 = arith.constant 5.000000e-01 : f32
    %17 = vector.broadcast %cst_6 : f32 to vector<8x128xf32>
    %18 = arith.addf %16, %17 : vector<8x128xf32>
    %cst_7 = arith.constant 6.250000e-02 : f32
    %19 = vector.broadcast %cst_7 : f32 to vector<8x128xf32>
    %20 = arith.mulf %18, %19 : vector<8x128xf32>
    %21 = math.floor %20 : vector<8x128xf32>
    %22 = arith.cmpf oeq, %21, %13 : vector<8x128xf32>
    %23 = arith.subf %16, %8 : vector<8x128xf32>
    %24 = math.absf %23 : vector<8x128xf32>
    %cst_8 = arith.constant 1.000000e+00 : f32
    %25 = vector.broadcast %cst_8 : f32 to vector<8x128xf32>
    %26 = arith.cmpf oeq, %24, %25 : vector<8x128xf32>
    %27 = arith.andi %22, %26 : vector<8x128xi1>
    %28 = arith.extui %27 : vector<8x128xi1> to vector<8x128xi32>
    %29 = arith.sitofp %28 : vector<8x128xi32> to vector<8x128xf32>
    %30 = vector.extract_strided_slice %29 {offsets = [0, 0], sizes = [1, 128], strides = [1, 1]} : vector<8x128xf32> to vector<1x128xf32>
    %31 = vector.shape_cast %30 : vector<1x128xf32> to vector<1x128xf32>
    %32 = vector.broadcast %31 : vector<1x128xf32> to vector<16x128xf32>
    %c127_i32 = arith.constant 127 : i32
    %33 = tpu.dynamic_rotate %8 by %c127_i32 dim 1 : vector<8x128xf32>, i32 -> vector<8x128xf32>
    %cst_9 = arith.constant 5.000000e-01 : f32
    %34 = vector.broadcast %cst_9 : f32 to vector<8x128xf32>
    %35 = arith.addf %33, %34 : vector<8x128xf32>
    %cst_10 = arith.constant 6.250000e-02 : f32
    %36 = vector.broadcast %cst_10 : f32 to vector<8x128xf32>
    %37 = arith.mulf %35, %36 : vector<8x128xf32>
    %38 = math.floor %37 : vector<8x128xf32>
    %39 = arith.cmpf oeq, %38, %13 : vector<8x128xf32>
    %40 = arith.subf %33, %8 : vector<8x128xf32>
    %41 = math.absf %40 : vector<8x128xf32>
    %cst_11 = arith.constant 1.000000e+00 : f32
    %42 = vector.broadcast %cst_11 : f32 to vector<8x128xf32>
    %43 = arith.cmpf oeq, %41, %42 : vector<8x128xf32>
    %44 = arith.andi %39, %43 : vector<8x128xi1>
    %45 = arith.extui %44 : vector<8x128xi1> to vector<8x128xi32>
    %46 = arith.sitofp %45 : vector<8x128xi32> to vector<8x128xf32>
    %47 = vector.extract_strided_slice %46 {offsets = [0, 0], sizes = [1, 128], strides = [1, 1]} : vector<8x128xf32> to vector<1x128xf32>
    %48 = vector.shape_cast %47 : vector<1x128xf32> to vector<1x128xf32>
    %49 = vector.broadcast %48 : vector<1x128xf32> to vector<16x128xf32>
    %c2_i32 = arith.constant 2 : i32
    %50 = tpu.dynamic_rotate %8 by %c2_i32 dim 1 : vector<8x128xf32>, i32 -> vector<8x128xf32>
    %cst_12 = arith.constant 5.000000e-01 : f32
    %51 = vector.broadcast %cst_12 : f32 to vector<8x128xf32>
    %52 = arith.addf %50, %51 : vector<8x128xf32>
    %cst_13 = arith.constant 6.250000e-02 : f32
    %53 = vector.broadcast %cst_13 : f32 to vector<8x128xf32>
    %54 = arith.mulf %52, %53 : vector<8x128xf32>
    %55 = math.floor %54 : vector<8x128xf32>
    %56 = arith.cmpf oeq, %55, %13 : vector<8x128xf32>
    %57 = arith.subf %50, %8 : vector<8x128xf32>
    %58 = math.absf %57 : vector<8x128xf32>
    %cst_14 = arith.constant 2.000000e+00 : f32
    %59 = vector.broadcast %cst_14 : f32 to vector<8x128xf32>
    %60 = arith.cmpf oeq, %58, %59 : vector<8x128xf32>
    %61 = arith.andi %56, %60 : vector<8x128xi1>
    %62 = arith.extui %61 : vector<8x128xi1> to vector<8x128xi32>
    %63 = arith.sitofp %62 : vector<8x128xi32> to vector<8x128xf32>
    %64 = vector.extract_strided_slice %63 {offsets = [0, 0], sizes = [1, 128], strides = [1, 1]} : vector<8x128xf32> to vector<1x128xf32>
    %65 = vector.shape_cast %64 : vector<1x128xf32> to vector<1x128xf32>
    %66 = vector.broadcast %65 : vector<1x128xf32> to vector<16x128xf32>
    %c126_i32 = arith.constant 126 : i32
    %67 = tpu.dynamic_rotate %8 by %c126_i32 dim 1 : vector<8x128xf32>, i32 -> vector<8x128xf32>
    %cst_15 = arith.constant 5.000000e-01 : f32
    %68 = vector.broadcast %cst_15 : f32 to vector<8x128xf32>
    %69 = arith.addf %67, %68 : vector<8x128xf32>
    %cst_16 = arith.constant 6.250000e-02 : f32
    %70 = vector.broadcast %cst_16 : f32 to vector<8x128xf32>
    %71 = arith.mulf %69, %70 : vector<8x128xf32>
    %72 = math.floor %71 : vector<8x128xf32>
    %73 = arith.cmpf oeq, %72, %13 : vector<8x128xf32>
    %74 = arith.subf %67, %8 : vector<8x128xf32>
    %75 = math.absf %74 : vector<8x128xf32>
    %cst_17 = arith.constant 2.000000e+00 : f32
    %76 = vector.broadcast %cst_17 : f32 to vector<8x128xf32>
    %77 = arith.cmpf oeq, %75, %76 : vector<8x128xf32>
    %78 = arith.andi %73, %77 : vector<8x128xi1>
    %79 = arith.extui %78 : vector<8x128xi1> to vector<8x128xi32>
    %80 = arith.sitofp %79 : vector<8x128xi32> to vector<8x128xf32>
    %81 = vector.extract_strided_slice %80 {offsets = [0, 0], sizes = [1, 128], strides = [1, 1]} : vector<8x128xf32> to vector<1x128xf32>
    %82 = vector.shape_cast %81 : vector<1x128xf32> to vector<1x128xf32>
    %83 = vector.broadcast %82 : vector<1x128xf32> to vector<16x128xf32>
    %c1_i32_18 = arith.constant 1 : i32
    %84 = tpu.dynamic_rotate %15 by %c1_i32_18 dim 0 : vector<16x128xf32>, i32 -> vector<16x128xf32>
    %85 = arith.subf %84, %15 : vector<16x128xf32>
    %86 = math.absf %85 : vector<16x128xf32>
    %cst_19 = arith.constant 1.000000e+00 : f32
    %87 = vector.broadcast %cst_19 : f32 to vector<16x128xf32>
    %88 = arith.cmpf oeq, %86, %87 : vector<16x128xf32>
    %89 = arith.extui %88 : vector<16x128xi1> to vector<16x128xi32>
    %90 = arith.sitofp %89 : vector<16x128xi32> to vector<16x128xf32>
    %91 = vector.extract_strided_slice %90 {offsets = [0, 0], sizes = [16, 1], strides = [1, 1]} : vector<16x128xf32> to vector<16x1xf32>
    %92 = vector.shape_cast %91 : vector<16x1xf32> to vector<16x1xf32>
    %93 = vector.broadcast %92 : vector<16x1xf32> to vector<16x128xf32>
    %c15_i32 = arith.constant 15 : i32
    %94 = tpu.dynamic_rotate %15 by %c15_i32 dim 0 : vector<16x128xf32>, i32 -> vector<16x128xf32>
    %95 = arith.subf %94, %15 : vector<16x128xf32>
    %96 = math.absf %95 : vector<16x128xf32>
    %cst_20 = arith.constant 1.000000e+00 : f32
    %97 = vector.broadcast %cst_20 : f32 to vector<16x128xf32>
    %98 = arith.cmpf oeq, %96, %97 : vector<16x128xf32>
    %99 = arith.extui %98 : vector<16x128xi1> to vector<16x128xi32>
    %100 = arith.sitofp %99 : vector<16x128xi32> to vector<16x128xf32>
    %101 = vector.extract_strided_slice %100 {offsets = [0, 0], sizes = [16, 1], strides = [1, 1]} : vector<16x128xf32> to vector<16x1xf32>
    %102 = vector.shape_cast %101 : vector<16x1xf32> to vector<16x1xf32>
    %103 = vector.broadcast %102 : vector<16x1xf32> to vector<16x128xf32>
    %c2_i32_21 = arith.constant 2 : i32
    %104 = tpu.dynamic_rotate %15 by %c2_i32_21 dim 0 : vector<16x128xf32>, i32 -> vector<16x128xf32>
    %105 = arith.subf %104, %15 : vector<16x128xf32>
    %106 = math.absf %105 : vector<16x128xf32>
    %cst_22 = arith.constant 2.000000e+00 : f32
    %107 = vector.broadcast %cst_22 : f32 to vector<16x128xf32>
    %108 = arith.cmpf oeq, %106, %107 : vector<16x128xf32>
    %109 = arith.extui %108 : vector<16x128xi1> to vector<16x128xi32>
    %110 = arith.sitofp %109 : vector<16x128xi32> to vector<16x128xf32>
    %111 = vector.extract_strided_slice %110 {offsets = [0, 0], sizes = [16, 1], strides = [1, 1]} : vector<16x128xf32> to vector<16x1xf32>
    %112 = vector.shape_cast %111 : vector<16x1xf32> to vector<16x1xf32>
    %113 = vector.broadcast %112 : vector<16x1xf32> to vector<16x128xf32>
    %c14_i32 = arith.constant 14 : i32
    %114 = tpu.dynamic_rotate %15 by %c14_i32 dim 0 : vector<16x128xf32>, i32 -> vector<16x128xf32>
    %115 = arith.subf %114, %15 : vector<16x128xf32>
    %116 = math.absf %115 : vector<16x128xf32>
    %cst_23 = arith.constant 2.000000e+00 : f32
    %117 = vector.broadcast %cst_23 : f32 to vector<16x128xf32>
    %118 = arith.cmpf oeq, %116, %117 : vector<16x128xf32>
    %119 = arith.extui %118 : vector<16x128xi1> to vector<16x128xi32>
    %120 = arith.sitofp %119 : vector<16x128xi32> to vector<16x128xf32>
    %121 = vector.extract_strided_slice %120 {offsets = [0, 0], sizes = [16, 1], strides = [1, 1]} : vector<16x128xf32> to vector<16x1xf32>
    %122 = vector.shape_cast %121 : vector<16x1xf32> to vector<16x1xf32>
    %123 = vector.broadcast %122 : vector<16x1xf32> to vector<16x128xf32>
    %c1_i32_24 = arith.constant 1 : i32
    %124 = tpu.dynamic_rotate %3 by %c1_i32_24 dim 1 : vector<16x128xf32>, i32 -> vector<16x128xf32>
    %125 = arith.mulf %32, %124 : vector<16x128xf32>
    %126 = arith.addf %3, %125 : vector<16x128xf32>
    %c127_i32_25 = arith.constant 127 : i32
    %127 = tpu.dynamic_rotate %3 by %c127_i32_25 dim 1 : vector<16x128xf32>, i32 -> vector<16x128xf32>
    %128 = arith.mulf %49, %127 : vector<16x128xf32>
    %129 = arith.addf %126, %128 : vector<16x128xf32>
    %c2_i32_26 = arith.constant 2 : i32
    %130 = tpu.dynamic_rotate %3 by %c2_i32_26 dim 1 : vector<16x128xf32>, i32 -> vector<16x128xf32>
    %131 = arith.mulf %66, %130 : vector<16x128xf32>
    %132 = arith.addf %129, %131 : vector<16x128xf32>
    %c126_i32_27 = arith.constant 126 : i32
    %133 = tpu.dynamic_rotate %3 by %c126_i32_27 dim 1 : vector<16x128xf32>, i32 -> vector<16x128xf32>
    %134 = arith.mulf %83, %133 : vector<16x128xf32>
    %135 = arith.addf %132, %134 : vector<16x128xf32>
    %c1_i32_28 = arith.constant 1 : i32
    %136 = tpu.dynamic_rotate %129 by %c1_i32_28 dim 0 : vector<16x128xf32>, i32 -> vector<16x128xf32>
    %137 = arith.mulf %93, %136 : vector<16x128xf32>
    %138 = arith.addf %135, %137 : vector<16x128xf32>
    %c15_i32_29 = arith.constant 15 : i32
    %139 = tpu.dynamic_rotate %129 by %c15_i32_29 dim 0 : vector<16x128xf32>, i32 -> vector<16x128xf32>
    %140 = arith.mulf %103, %139 : vector<16x128xf32>
    %141 = arith.addf %138, %140 : vector<16x128xf32>
    %c2_i32_30 = arith.constant 2 : i32
    %142 = tpu.dynamic_rotate %3 by %c2_i32_30 dim 0 : vector<16x128xf32>, i32 -> vector<16x128xf32>
    %143 = arith.mulf %113, %142 : vector<16x128xf32>
    %144 = arith.addf %141, %143 : vector<16x128xf32>
    %c14_i32_31 = arith.constant 14 : i32
    %145 = tpu.dynamic_rotate %3 by %c14_i32_31 dim 0 : vector<16x128xf32>, i32 -> vector<16x128xf32>
    %146 = arith.mulf %123, %145 : vector<16x128xf32>
    %147 = arith.addf %144, %146 : vector<16x128xf32>
    %cst_32 = arith.constant 9.99999997E-7 : f32
    %148 = vector.broadcast %cst_32 : f32 to vector<16x128xf32>
    %149 = arith.cmpf olt, %147, %148 : vector<16x128xf32>
    %150 = arith.extui %149 : vector<16x128xi1> to vector<16x128xi32>
    %151 = arith.sitofp %150 : vector<16x128xi32> to vector<16x128xf32>
    %152 = arith.mulf %147, %0 : vector<16x128xf32>
    %153 = arith.addf %152, %3 : vector<16x128xf32>
    %154 = arith.addf %153, %151 : vector<16x128xf32>
    %155 = tpu.reciprocal %154 {approx = true} : vector<16x128xf32> -> vector<16x128xf32>
    %156 = arith.mulf %154, %155 : vector<16x128xf32>
    %cst_33 = arith.constant 2.000000e+00 : f32
    %157 = vector.broadcast %cst_33 : f32 to vector<16x128xf32>
    %158 = arith.subf %157, %156 : vector<16x128xf32>
    %159 = arith.mulf %155, %158 : vector<16x128xf32>
    %160 = arith.subf %0, %151 : vector<16x128xf32>
    %161 = arith.mulf %160, %159 : vector<16x128xf32>
    %cst_34 = arith.constant 1.000000e+00 : f32
    %162 = vector.broadcast %cst_34 : f32 to vector<16x128xf32>
    %163 = arith.subf %162, %1 : vector<16x128xf32>
    %164 = arith.mulf %161, %163 : vector<16x128xf32>
    %165 = arith.addf %3, %151 : vector<16x128xf32>
    %cst_35 = arith.constant 1.000000e+00 : f32
    %166 = vector.broadcast %cst_35 : f32 to vector<16x128xf32>
    %167 = arith.subf %165, %166 : vector<16x128xf32>
    %c0_36 = arith.constant 0 : index
    %c0_37 = arith.constant 0 : index
    %c0_38 = arith.constant 0 : index
    %168 = vector.load %arg1[%c0_36, %c0_37, %c0_38] : memref<3x16x128xf32, #tpu.memory_space<vmem>>, vector<1x16x128xf32>
    %169 = vector.shape_cast %168 : vector<1x16x128xf32> to vector<16x128xf32>
    %cst_39 = arith.constant 1.000000e+00 : f32
    %170 = vector.broadcast %cst_39 : f32 to vector<16x128xf32>
    %171 = arith.addf %169, %170 : vector<16x128xf32>
    %172 = arith.mulf %171, %6 : vector<16x128xf32>
    %c1_i32_40 = arith.constant 1 : i32
    %173 = tpu.dynamic_rotate %172 by %c1_i32_40 dim 1 : vector<16x128xf32>, i32 -> vector<16x128xf32>
    %174 = arith.mulf %32, %173 : vector<16x128xf32>
    %175 = arith.addf %172, %174 : vector<16x128xf32>
    %c127_i32_41 = arith.constant 127 : i32
    %176 = tpu.dynamic_rotate %172 by %c127_i32_41 dim 1 : vector<16x128xf32>, i32 -> vector<16x128xf32>
    %177 = arith.mulf %49, %176 : vector<16x128xf32>
    %178 = arith.addf %175, %177 : vector<16x128xf32>
    %c2_i32_42 = arith.constant 2 : i32
    %179 = tpu.dynamic_rotate %172 by %c2_i32_42 dim 1 : vector<16x128xf32>, i32 -> vector<16x128xf32>
    %180 = arith.mulf %66, %179 : vector<16x128xf32>
    %181 = arith.addf %178, %180 : vector<16x128xf32>
    %c126_i32_43 = arith.constant 126 : i32
    %182 = tpu.dynamic_rotate %172 by %c126_i32_43 dim 1 : vector<16x128xf32>, i32 -> vector<16x128xf32>
    %183 = arith.mulf %83, %182 : vector<16x128xf32>
    %184 = arith.addf %181, %183 : vector<16x128xf32>
    %c1_i32_44 = arith.constant 1 : i32
    %185 = tpu.dynamic_rotate %178 by %c1_i32_44 dim 0 : vector<16x128xf32>, i32 -> vector<16x128xf32>
    %186 = arith.mulf %93, %185 : vector<16x128xf32>
    %187 = arith.addf %184, %186 : vector<16x128xf32>
    %c15_i32_45 = arith.constant 15 : i32
    %188 = tpu.dynamic_rotate %178 by %c15_i32_45 dim 0 : vector<16x128xf32>, i32 -> vector<16x128xf32>
    %189 = arith.mulf %103, %188 : vector<16x128xf32>
    %190 = arith.addf %187, %189 : vector<16x128xf32>
    %c2_i32_46 = arith.constant 2 : i32
    %191 = tpu.dynamic_rotate %172 by %c2_i32_46 dim 0 : vector<16x128xf32>, i32 -> vector<16x128xf32>
    %192 = arith.mulf %113, %191 : vector<16x128xf32>
    %193 = arith.addf %190, %192 : vector<16x128xf32>
    %c14_i32_47 = arith.constant 14 : i32
    %194 = tpu.dynamic_rotate %172 by %c14_i32_47 dim 0 : vector<16x128xf32>, i32 -> vector<16x128xf32>
    %195 = arith.mulf %123, %194 : vector<16x128xf32>
    %196 = arith.addf %193, %195 : vector<16x128xf32>
    %197 = arith.mulf %196, %164 : vector<16x128xf32>
    %198 = arith.mulf %169, %165 : vector<16x128xf32>
    %199 = arith.addf %197, %198 : vector<16x128xf32>
    %200 = arith.addf %199, %167 : vector<16x128xf32>
    %cst_48 = arith.constant -1.000000e+00 : f32
    %cst_49 = arith.constant 1.000000e+00 : f32
    %201 = vector.broadcast %cst_48 : f32 to vector<16x128xf32>
    %202 = arith.maximumf %201, %200 : vector<16x128xf32>
    %203 = vector.broadcast %cst_49 : f32 to vector<16x128xf32>
    %204 = arith.minimumf %203, %202 : vector<16x128xf32>
    %c0_50 = arith.constant 0 : index
    %c0_51 = arith.constant 0 : index
    %c0_52 = arith.constant 0 : index
    %205 = vector.load %arg4[%c0_50, %c0_51, %c0_52] : memref<3x16x128xf32, #tpu.memory_space<vmem>>, vector<1x16x128xf32>
    %206 = vector.shape_cast %205 : vector<1x16x128xf32> to vector<16x128xf32>
    %207 = vector.shape_cast %204 : vector<16x128xf32> to vector<1x16x128xf32>
    tpu.vector_store %arg4[%c0_50, %c0_51, %c0_52], %207 {strides = array<i32>} : memref<3x16x128xf32, #tpu.memory_space<vmem>>, vector<1x16x128xf32>,
    %c1 = arith.constant 1 : index
    %c0_53 = arith.constant 0 : index
    %c0_54 = arith.constant 0 : index
    %208 = vector.load %arg1[%c1, %c0_53, %c0_54] : memref<3x16x128xf32, #tpu.memory_space<vmem>>, vector<1x16x128xf32>
    %209 = vector.shape_cast %208 : vector<1x16x128xf32> to vector<16x128xf32>
    %cst_55 = arith.constant 1.000000e+00 : f32
    %210 = vector.broadcast %cst_55 : f32 to vector<16x128xf32>
    %211 = arith.addf %209, %210 : vector<16x128xf32>
    %212 = arith.mulf %211, %6 : vector<16x128xf32>
    %c1_i32_56 = arith.constant 1 : i32
    %213 = tpu.dynamic_rotate %212 by %c1_i32_56 dim 1 : vector<16x128xf32>, i32 -> vector<16x128xf32>
    %214 = arith.mulf %32, %213 : vector<16x128xf32>
    %215 = arith.addf %212, %214 : vector<16x128xf32>
    %c127_i32_57 = arith.constant 127 : i32
    %216 = tpu.dynamic_rotate %212 by %c127_i32_57 dim 1 : vector<16x128xf32>, i32 -> vector<16x128xf32>
    %217 = arith.mulf %49, %216 : vector<16x128xf32>
    %218 = arith.addf %215, %217 : vector<16x128xf32>
    %c2_i32_58 = arith.constant 2 : i32
    %219 = tpu.dynamic_rotate %212 by %c2_i32_58 dim 1 : vector<16x128xf32>, i32 -> vector<16x128xf32>
    %220 = arith.mulf %66, %219 : vector<16x128xf32>
    %221 = arith.addf %218, %220 : vector<16x128xf32>
    %c126_i32_59 = arith.constant 126 : i32
    %222 = tpu.dynamic_rotate %212 by %c126_i32_59 dim 1 : vector<16x128xf32>, i32 -> vector<16x128xf32>
    %223 = arith.mulf %83, %222 : vector<16x128xf32>
    %224 = arith.addf %221, %223 : vector<16x128xf32>
    %c1_i32_60 = arith.constant 1 : i32
    %225 = tpu.dynamic_rotate %218 by %c1_i32_60 dim 0 : vector<16x128xf32>, i32 -> vector<16x128xf32>
    %226 = arith.mulf %93, %225 : vector<16x128xf32>
    %227 = arith.addf %224, %226 : vector<16x128xf32>
    %c15_i32_61 = arith.constant 15 : i32
    %228 = tpu.dynamic_rotate %218 by %c15_i32_61 dim 0 : vector<16x128xf32>, i32 -> vector<16x128xf32>
    %229 = arith.mulf %103, %228 : vector<16x128xf32>
    %230 = arith.addf %227, %229 : vector<16x128xf32>
    %c2_i32_62 = arith.constant 2 : i32
    %231 = tpu.dynamic_rotate %212 by %c2_i32_62 dim 0 : vector<16x128xf32>, i32 -> vector<16x128xf32>
    %232 = arith.mulf %113, %231 : vector<16x128xf32>
    %233 = arith.addf %230, %232 : vector<16x128xf32>
    %c14_i32_63 = arith.constant 14 : i32
    %234 = tpu.dynamic_rotate %212 by %c14_i32_63 dim 0 : vector<16x128xf32>, i32 -> vector<16x128xf32>
    %235 = arith.mulf %123, %234 : vector<16x128xf32>
    %236 = arith.addf %233, %235 : vector<16x128xf32>
    %237 = arith.mulf %236, %164 : vector<16x128xf32>
    %238 = arith.mulf %209, %165 : vector<16x128xf32>
    %239 = arith.addf %237, %238 : vector<16x128xf32>
    %240 = arith.addf %239, %167 : vector<16x128xf32>
    %cst_64 = arith.constant -1.000000e+00 : f32
    %cst_65 = arith.constant 1.000000e+00 : f32
    %241 = vector.broadcast %cst_64 : f32 to vector<16x128xf32>
    %242 = arith.maximumf %241, %240 : vector<16x128xf32>
    %243 = vector.broadcast %cst_65 : f32 to vector<16x128xf32>
    %244 = arith.minimumf %243, %242 : vector<16x128xf32>
    %c1_66 = arith.constant 1 : index
    %c0_67 = arith.constant 0 : index
    %c0_68 = arith.constant 0 : index
    %245 = vector.load %arg4[%c1_66, %c0_67, %c0_68] : memref<3x16x128xf32, #tpu.memory_space<vmem>>, vector<1x16x128xf32>
    %246 = vector.shape_cast %245 : vector<1x16x128xf32> to vector<16x128xf32>
    %247 = vector.shape_cast %244 : vector<16x128xf32> to vector<1x16x128xf32>
    tpu.vector_store %arg4[%c1_66, %c0_67, %c0_68], %247 {strides = array<i32>} : memref<3x16x128xf32, #tpu.memory_space<vmem>>, vector<1x16x128xf32>,
    %c2 = arith.constant 2 : index
    %c0_69 = arith.constant 0 : index
    %c0_70 = arith.constant 0 : index
    %248 = vector.load %arg1[%c2, %c0_69, %c0_70] : memref<3x16x128xf32, #tpu.memory_space<vmem>>, vector<1x16x128xf32>
    %249 = vector.shape_cast %248 : vector<1x16x128xf32> to vector<16x128xf32>
    %cst_71 = arith.constant 1.000000e+00 : f32
    %250 = vector.broadcast %cst_71 : f32 to vector<16x128xf32>
    %251 = arith.addf %249, %250 : vector<16x128xf32>
    %252 = arith.mulf %251, %6 : vector<16x128xf32>
    %c1_i32_72 = arith.constant 1 : i32
    %253 = tpu.dynamic_rotate %252 by %c1_i32_72 dim 1 : vector<16x128xf32>, i32 -> vector<16x128xf32>
    %254 = arith.mulf %32, %253 : vector<16x128xf32>
    %255 = arith.addf %252, %254 : vector<16x128xf32>
    %c127_i32_73 = arith.constant 127 : i32
    %256 = tpu.dynamic_rotate %252 by %c127_i32_73 dim 1 : vector<16x128xf32>, i32 -> vector<16x128xf32>
    %257 = arith.mulf %49, %256 : vector<16x128xf32>
    %258 = arith.addf %255, %257 : vector<16x128xf32>
    %c2_i32_74 = arith.constant 2 : i32
    %259 = tpu.dynamic_rotate %252 by %c2_i32_74 dim 1 : vector<16x128xf32>, i32 -> vector<16x128xf32>
    %260 = arith.mulf %66, %259 : vector<16x128xf32>
    %261 = arith.addf %258, %260 : vector<16x128xf32>
    %c126_i32_75 = arith.constant 126 : i32
    %262 = tpu.dynamic_rotate %252 by %c126_i32_75 dim 1 : vector<16x128xf32>, i32 -> vector<16x128xf32>
    %263 = arith.mulf %83, %262 : vector<16x128xf32>
    %264 = arith.addf %261, %263 : vector<16x128xf32>
    %c1_i32_76 = arith.constant 1 : i32
    %265 = tpu.dynamic_rotate %258 by %c1_i32_76 dim 0 : vector<16x128xf32>, i32 -> vector<16x128xf32>
    %266 = arith.mulf %93, %265 : vector<16x128xf32>
    %267 = arith.addf %264, %266 : vector<16x128xf32>
    %c15_i32_77 = arith.constant 15 : i32
    %268 = tpu.dynamic_rotate %258 by %c15_i32_77 dim 0 : vector<16x128xf32>, i32 -> vector<16x128xf32>
    %269 = arith.mulf %103, %268 : vector<16x128xf32>
    %270 = arith.addf %267, %269 : vector<16x128xf32>
    %c2_i32_78 = arith.constant 2 : i32
    %271 = tpu.dynamic_rotate %252 by %c2_i32_78 dim 0 : vector<16x128xf32>, i32 -> vector<16x128xf32>
    %272 = arith.mulf %113, %271 : vector<16x128xf32>
    %273 = arith.addf %270, %272 : vector<16x128xf32>
    %c14_i32_79 = arith.constant 14 : i32
    %274 = tpu.dynamic_rotate %252 by %c14_i32_79 dim 0 : vector<16x128xf32>, i32 -> vector<16x128xf32>
    %275 = arith.mulf %123, %274 : vector<16x128xf32>
    %276 = arith.addf %273, %275 : vector<16x128xf32>
    %277 = arith.mulf %276, %164 : vector<16x128xf32>
    %278 = arith.mulf %249, %165 : vector<16x128xf32>
    %279 = arith.addf %277, %278 : vector<16x128xf32>
    %280 = arith.addf %279, %167 : vector<16x128xf32>
    %cst_80 = arith.constant -1.000000e+00 : f32
    %cst_81 = arith.constant 1.000000e+00 : f32
    %281 = vector.broadcast %cst_80 : f32 to vector<16x128xf32>
    %282 = arith.maximumf %281, %280 : vector<16x128xf32>
    %283 = vector.broadcast %cst_81 : f32 to vector<16x128xf32>
    %284 = arith.minimumf %283, %282 : vector<16x128xf32>
    %c2_82 = arith.constant 2 : index
    %c0_83 = arith.constant 0 : index
    %c0_84 = arith.constant 0 : index
    %285 = vector.load %arg4[%c2_82, %c0_83, %c0_84] : memref<3x16x128xf32, #tpu.memory_space<vmem>>, vector<1x16x128xf32>
    %286 = vector.shape_cast %285 : vector<1x16x128xf32> to vector<16x128xf32>
    %287 = vector.shape_cast %284 : vector<16x128xf32> to vector<1x16x128xf32>
    tpu.vector_store %arg4[%c2_82, %c0_83, %c0_84], %287 {strides = array<i32>} : memref<3x16x128xf32, #tpu.memory_space<vmem>>, vector<1x16x128xf32>,
    return
  }
  func.func @transform_0(%arg0: i32) -> (i32, i32, i32) {
    %c0_i32 = arith.constant 0 : i32
    %c0_i32_0 = arith.constant 0 : i32
    %c0_i32_1 = arith.constant 0 : i32
    return %c0_i32, %c0_i32_0, %arg0 : i32, i32, i32
  }
  func.func @transform_1(%arg0: i32) -> (i32, i32) {
    %c0_i32 = arith.constant 0 : i32
    %c0_i32_0 = arith.constant 0 : i32
    return %c0_i32, %arg0 : i32, i32
  }
  func.func @transform_2(%arg0: i32) -> (i32, i32) {
    %c0_i32 = arith.constant 0 : i32
    %c0_i32_0 = arith.constant 0 : i32
    return %c0_i32, %arg0 : i32, i32
  }
  func.func @transform_3(%arg0: i32) -> (i32, i32, i32) {
    %c0_i32 = arith.constant 0 : i32
    %c0_i32_0 = arith.constant 0 : i32
    %c0_i32_1 = arith.constant 0 : i32
    return %c0_i32, %c0_i32_0, %arg0 : i32, i32, i32
  }
}

</mosaic_0001>

<llo_original>
// kernel: forward.1
$region0: #{forward.1}
  #allocation0 [shape = 'u32[]', space=smem, size = 0x4, offset = 0x4, fixed_abs, tag = 'smem constant byte address 0x4 - core index']
  #allocation1 [shape = 'u32[144,128]{1,0:T(1,128)}', space=vmem, size = 0x12000, scoped, tag = 'internal scratch']
  %s0 = inlined_call_operand.vmem [shape: f32[3,16,128], index: 0, kind: input, shape index: {}]
  %s1 = inlined_call_operand.vmem [shape: f32[16,128], index: 1, kind: input, shape index: {}]
  %s2 = inlined_call_operand.vmem [shape: f32[16,128], index: 2, kind: input, shape index: {}]
  %s3 = inlined_call_operand.vmem [shape: f32[3,16,128], index: 3, kind: output, shape index: {}]
  %s4 = sld [smem:[#allocation0]]
  $region22: #{forward.1} parent=0
    _
  %s6 = ssub.s32 1, %s4
  %s7 = scalar_select 0, %s6, %s4
  // Predicated region
  $region2: #{forward.1} parent=0 // pred_check
    _
  $region3: #{forward.1} parent=0 // pred_check_branch
    %9 = sbr.rel (0) target = $region5
  $region4: #{forward.1} parent=0 // pred_region
    _
  $region5: #{forward.1} parent=0 // pred_fallthru
    _
  // Predicated region
  $region6: #{forward.1} parent=0 // pred_check
    _
  $region7: #{forward.1} parent=0 // pred_check_branch
    %11 = sbr.rel (0) target = $region9
  $region8: #{forward.1} parent=0 // pred_region
    _
  $region9: #{forward.1} parent=0 // pred_fallthru
    _
  // Predicated region
  $region10: #{forward.1} parent=0 // pred_check
    _
  $region11: #{forward.1} parent=0 // pred_check_branch
    %13 = sbr.rel (0) target = $region13
  $region12: #{forward.1} parent=0 // pred_region
    _
  $region13: #{forward.1} parent=0 // pred_fallthru
    _
  %v14 = vld [vmem:[%s1] sm:$0xff]
  %v15 = vld [vmem:[%s1 + $0x8] sm:$0xff]
  %v16 = vld [vmem:[%s2] sm:$0xff]
  %v17 = vld [vmem:[%s2 + $0x8] sm:$0xff]
  %v18 = vsub.f32 1.0, %v14
  %v19 = vsub.f32 1.0, %v15
  %v20 = vsub.f32 %v18, %v16
  %v21 = vsub.f32 %v19, %v17
  %v22 = vmax.f32 %v20, 0.0
  %v23 = vmax.f32 %v21, 0.0
  %v24 = vlaneseq
  %v25 = vand.u32 %v24, 127
  %v26 = vcvt.s32.f32 %v25
  %v27 = vadd.f32 %v26, 0.5
  %v28 = vmul.f32 %v27, 0.0625
  %v29 = vfloor.f32 %v28
  %v30 = vlaneseq
  %v31 = vshrl.u32 %v30, 7
  %v32 = vadd.s32 %v31, 8
  %v33 = vcvt.s32.f32 %v31
  %v34 = vcvt.s32.f32 %v32
  %35 = vrot.lane.b32.xlu0 %v26, 1
  %v36 = vpop.permute.xlu0 %35
  %v37 = vadd.f32 %v36, 0.5
  %v38 = vmul.f32 %v37, 0.0625
  %v39 = vfloor.f32 %v38
  %vm40 = vcmp.eq.f32.partialorder %v39, %v29
  %v41 = vsub.f32 %v36, %v26
  %v42 = vand.u32 2147483647, %v41
  %vm43 = vcmp.eq.f32.partialorder %v42, 1.0
  %vm44 = vmand %vm40, %vm43
  %v45 = vsel %vm44, 1, 0
  %v46 = vcvt.s32.f32 %v45
  %v47 = vlaneseq
  %v48 = vshrl.u32 %v47, 7
  %v49 = vsub.s32 0, %v48
  %v50 = vrot.slane %v46, %v49
  %51 = vrot.lane.b32.xlu0 %v26, 127
  %v52 = vpop.permute.xlu0 %51
  %v53 = vadd.f32 %v52, 0.5
  %v54 = vmul.f32 %v53, 0.0625
  %v55 = vfloor.f32 %v54
  %vm56 = vcmp.eq.f32.partialorder %v55, %v29
  %v57 = vsub.f32 %v52, %v26
  %v58 = vand.u32 2147483647, %v57
  %vm59 = vcmp.eq.f32.partialorder %v58, 1.0
  %vm60 = vmand %vm56, %vm59
  %v61 = vsel %vm60, 1, 0
  %v62 = vcvt.s32.f32 %v61
  %v63 = vlaneseq
  %v64 = vshrl.u32 %v63, 7
  %v65 = vsub.s32 0, %v64
  %v66 = vrot.slane %v62, %v65
  %67 = vrot.lane.b32.xlu0 %v26, 2
  %v68 = vpop.permute.xlu0 %67
  %v69 = vadd.f32 %v68, 0.5
  %v70 = vmul.f32 %v69, 0.0625
  %v71 = vfloor.f32 %v70
  %vm72 = vcmp.eq.f32.partialorder %v71, %v29
  %v73 = vsub.f32 %v68, %v26
  %v74 = vand.u32 2147483647, %v73
  %vm75 = vcmp.eq.f32.partialorder %v74, 2.0
  %vm76 = vmand %vm72, %vm75
  %v77 = vsel %vm76, 1, 0
  %v78 = vcvt.s32.f32 %v77
  %v79 = vlaneseq
  %v80 = vshrl.u32 %v79, 7
  %v81 = vsub.s32 0, %v80
  %v82 = vrot.slane %v78, %v81
  %83 = vrot.lane.b32.xlu0 %v26, 126
  %v84 = vpop.permute.xlu0 %83
  %v85 = vadd.f32 %v84, 0.5
  %v86 = vmul.f32 %v85, 0.0625
  %v87 = vfloor.f32 %v86
  %vm88 = vcmp.eq.f32.partialorder %v87, %v29
  %v89 = vsub.f32 %v84, %v26
  %v90 = vand.u32 2147483647, %v89
  %vm91 = vcmp.eq.f32.partialorder %v90, 2.0
  %vm92 = vmand %vm88, %vm91
  %v93 = vsel %vm92, 1, 0
  %v94 = vcvt.s32.f32 %v93
  %v95 = vlaneseq
  %v96 = vshrl.u32 %v95, 7
  %v97 = vsub.s32 0, %v96
  %v98 = vrot.slane %v94, %v97
  %v99 = vrot.slane %v33, 7
  %v100 = vrot.slane %v34, 7
  %vm101 = vcmp.lt.s32.totalorder %v31, 1
  %v102 = vsel %vm101, %v99, %v100
  %v103 = vsel %vm101, %v100, %v99
  %v104 = vsub.f32 %v103, %v33
  %v105 = vsub.f32 %v102, %v34
  %v106 = vand.u32 2147483647, %v104
  %v107 = vand.u32 2147483647, %v105
  %vm108 = vcmp.eq.f32.partialorder %v106, 1.0
  %vm109 = vcmp.eq.f32.partialorder %v107, 1.0
  %v110 = vsel %vm108, 1, 0
  %v111 = vsel %vm109, 1, 0
  %v112 = vcvt.s32.f32 %v110
  %v113 = vcvt.s32.f32 %v111
  %115 = vset.pattern.permute.xlu0 0
  %116 = vperm.xlu0 %115, %v112
  %v117 = vpop.permute.xlu0 %116
  %120 = vset.pattern.permute.xlu0 0
  %121 = vperm.xlu0 %120, %v113
  %v122 = vpop.permute.xlu0 %121
  %v124 = vrot.slane %v33, 1
  %v125 = vrot.slane %v34, 1
  %vm126 = vcmp.lt.s32.totalorder %v31, 7
  %v127 = vsel %vm126, %v124, %v125
  %v128 = vsel %vm126, %v125, %v124
  %v129 = vsub.f32 %v127, %v33
  %v130 = vsub.f32 %v128, %v34
  %v131 = vand.u32 2147483647, %v129
  %v132 = vand.u32 2147483647, %v130
  %vm133 = vcmp.eq.f32.partialorder %v131, 1.0
  %vm134 = vcmp.eq.f32.partialorder %v132, 1.0
  %v135 = vsel %vm133, 1, 0
  %v136 = vsel %vm134, 1, 0
  %v137 = vcvt.s32.f32 %v135
  %v138 = vcvt.s32.f32 %v136
  %140 = vset.pattern.permute.xlu0 0
  %141 = vperm.xlu0 %140, %v137
  %v142 = vpop.permute.xlu0 %141
  %145 = vset.pattern.permute.xlu0 0
  %146 = vperm.xlu0 %145, %v138
  %v147 = vpop.permute.xlu0 %146
  %v149 = vrot.slane %v33, 6
  %v150 = vrot.slane %v34, 6
  %vm151 = vcmp.lt.s32.totalorder %v31, 2
  %v152 = vsel %vm151, %v149, %v150
  %v153 = vsel %vm151, %v150, %v149
  %v154 = vsub.f32 %v153, %v33
  %v155 = vsub.f32 %v152, %v34
  %v156 = vand.u32 2147483647, %v154
  %v157 = vand.u32 2147483647, %v155
  %vm158 = vcmp.eq.f32.partialorder %v156, 2.0
  %vm159 = vcmp.eq.f32.partialorder %v157, 2.0
  %v160 = vsel %vm158, 1, 0
  %v161 = vsel %vm159, 1, 0
  %v162 = vcvt.s32.f32 %v160
  %v163 = vcvt.s32.f32 %v161
  %165 = vset.pattern.permute.xlu0 0
  %166 = vperm.xlu0 %165, %v162
  %v167 = vpop.permute.xlu0 %166
  %170 = vset.pattern.permute.xlu0 0
  %171 = vperm.xlu0 %170, %v163
  %v172 = vpop.permute.xlu0 %171
  %v174 = vrot.slane %v33, 2
  %v175 = vrot.slane %v34, 2
  %vm176 = vcmp.lt.s32.totalorder %v31, 6
  %v177 = vsel %vm176, %v174, %v175
  %v178 = vsel %vm176, %v175, %v174
  %v179 = vsub.f32 %v177, %v33
  %v180 = vsub.f32 %v178, %v34
  %v181 = vand.u32 2147483647, %v179
  %v182 = vand.u32 2147483647, %v180
  %vm183 = vcmp.eq.f32.partialorder %v181, 2.0
  %vm184 = vcmp.eq.f32.partialorder %v182, 2.0
  %v185 = vsel %vm183, 1, 0
  %v186 = vsel %vm184, 1, 0
  %v187 = vcvt.s32.f32 %v185
  %v188 = vcvt.s32.f32 %v186
  %190 = vset.pattern.permute.xlu0 0
  %191 = vperm.xlu0 %190, %v187
  %v192 = vpop.permute.xlu0 %191
  %195 = vset.pattern.permute.xlu0 0
  %196 = vperm.xlu0 %195, %v188
  %v197 = vpop.permute.xlu0 %196
  %199 = vrot.lane.b32.xlu0 %v18, 1
  %v200 = vpop.permute.xlu0 %199
  %201 = vrot.lane.b32.xlu0 %v19, 1
  %v202 = vpop.permute.xlu0 %201
  %v203 = vmul.f32 %v50, %v200
  %v204 = vmul.f32 %v50, %v202
  %v205 = vadd.f32 %v18, %v203
  %v206 = vadd.f32 %v19, %v204
  %207 = vrot.lane.b32.xlu0 %v18, 127
  %v208 = vpop.permute.xlu0 %207
  %209 = vrot.lane.b32.xlu0 %v19, 127
  %v210 = vpop.permute.xlu0 %209
  %v211 = vmul.f32 %v66, %v208
  %v212 = vmul.f32 %v66, %v210
  %v213 = vadd.f32 %v205, %v211
  %v214 = vadd.f32 %v206, %v212
  %215 = vrot.lane.b32.xlu0 %v18, 2
  %v216 = vpop.permute.xlu0 %215
  %217 = vrot.lane.b32.xlu0 %v19, 2
  %v218 = vpop.permute.xlu0 %217
  %v219 = vmul.f32 %v82, %v216
  %v220 = vmul.f32 %v82, %v218
  %v221 = vadd.f32 %v213, %v219
  %v222 = vadd.f32 %v214, %v220
  %223 = vrot.lane.b32.xlu0 %v18, 126
  %v224 = vpop.permute.xlu0 %223
  %225 = vrot.lane.b32.xlu0 %v19, 126
  %v226 = vpop.permute.xlu0 %225
  %v227 = vmul.f32 %v98, %v224
  %v228 = vmul.f32 %v98, %v226
  %v229 = vadd.f32 %v221, %v227
  %v230 = vadd.f32 %v222, %v228
  %v231 = vrot.slane %v213, 7
  %v232 = vrot.slane %v214, 7
  %v233 = vsel %vm101, %v231, %v232
  %v234 = vsel %vm101, %v232, %v231
  %v235 = vmul.f32 %v117, %v234
  %v236 = vmul.f32 %v122, %v233
  %v237 = vadd.f32 %v229, %v235
  %v238 = vadd.f32 %v230, %v236
  %v239 = vrot.slane %v213, 1
  %v240 = vrot.slane %v214, 1
  %v241 = vsel %vm126, %v239, %v240
  %v242 = vsel %vm126, %v240, %v239
  %v243 = vmul.f32 %v142, %v241
  %v244 = vmul.f32 %v147, %v242
  %v245 = vadd.f32 %v237, %v243
  %v246 = vadd.f32 %v238, %v244
  %v247 = vrot.slane %v18, 6
  %v248 = vrot.slane %v19, 6
  %v249 = vsel %vm151, %v247, %v248
  %v250 = vsel %vm151, %v248, %v247
  %v251 = vmul.f32 %v167, %v250
  %v252 = vmul.f32 %v172, %v249
  %v253 = vadd.f32 %v245, %v251
  %v254 = vadd.f32 %v246, %v252
  %v255 = vrot.slane %v18, 2
  %v256 = vrot.slane %v19, 2
  %v257 = vsel %vm176, %v255, %v256
  %v258 = vsel %vm176, %v256, %v255
  %v259 = vmul.f32 %v192, %v257
  %v260 = vmul.f32 %v197, %v258
  %v261 = vadd.f32 %v253, %v259
  %v262 = vadd.f32 %v254, %v260
  %vm263 = vcmp.lt.f32.partialorder %v261, 1e-06
  %vm264 = vcmp.lt.f32.partialorder %v262, 1e-06
  %v265 = vsel %vm263, 1, 0
  %v266 = vsel %vm264, 1, 0
  %v267 = vcvt.s32.f32 %v265
  %v268 = vcvt.s32.f32 %v266
  %v269 = vmul.f32 %v261, %v14
  %v270 = vmul.f32 %v262, %v15
  %v271 = vadd.f32 %v269, %v18
  %v272 = vadd.f32 %v270, %v19
  %v273 = vadd.f32 %v271, %v267
  %v274 = vadd.f32 %v272, %v268
  %v275 = vrcp.pop %v273
  %v276 = vrcp.pop %v274
  %v277 = vmul.f32 %v273, %v275
  %v278 = vmul.f32 %v274, %v276
  %v279 = vsub.f32 2.0, %v277
  %v280 = vsub.f32 2.0, %v278
  %v281 = vmul.f32 %v275, %v279
  %v282 = vmul.f32 %v276, %v280
  %v283 = vsub.f32 %v14, %v267
  %v284 = vsub.f32 %v15, %v268
  %v285 = vmul.f32 %v283, %v281
  %v286 = vmul.f32 %v284, %v282
  %v287 = vsub.f32 1.0, %v16
  %v288 = vsub.f32 1.0, %v17
  %v289 = vmul.f32 %v285, %v287
  %v290 = vmul.f32 %v286, %v288
  %v291 = vadd.f32 %v18, %v267
  %v292 = vadd.f32 %v19, %v268
  %v293 = vsub.f32 %v291, 1.0
  %v294 = vsub.f32 %v292, 1.0
  %v295 = vld [vmem:[%s0] sm:$0xff]
  %v296 = vld [vmem:[%s0 + $0x8] sm:$0xff]
  %v297 = vadd.f32 %v295, 1.0
  %v298 = vadd.f32 %v296, 1.0
  %v299 = vmul.f32 %v297, %v22
  %v300 = vmul.f32 %v298, %v23
  %301 = vrot.lane.b32.xlu0 %v299, 1
  %v302 = vpop.permute.xlu0 %301
  %303 = vrot.lane.b32.xlu0 %v300, 1
  %v304 = vpop.permute.xlu0 %303
  %v305 = vmul.f32 %v50, %v302
  %v306 = vmul.f32 %v50, %v304
  %v307 = vadd.f32 %v299, %v305
  %v308 = vadd.f32 %v300, %v306
  %309 = vrot.lane.b32.xlu0 %v299, 127
  %v310 = vpop.permute.xlu0 %309
  %311 = vrot.lane.b32.xlu0 %v300, 127
  %v312 = vpop.permute.xlu0 %311
  %v313 = vmul.f32 %v66, %v310
  %v314 = vmul.f32 %v66, %v312
  %v315 = vadd.f32 %v307, %v313
  %v316 = vadd.f32 %v308, %v314
  %317 = vrot.lane.b32.xlu0 %v299, 2
  %v318 = vpop.permute.xlu0 %317
  %319 = vrot.lane.b32.xlu0 %v300, 2
  %v320 = vpop.permute.xlu0 %319
  %v321 = vmul.f32 %v82, %v318
  %v322 = vmul.f32 %v82, %v320
  %v323 = vadd.f32 %v315, %v321
  %v324 = vadd.f32 %v316, %v322
  %325 = vrot.lane.b32.xlu0 %v299, 126
  %v326 = vpop.permute.xlu0 %325
  %327 = vrot.lane.b32.xlu0 %v300, 126
  %v328 = vpop.permute.xlu0 %327
  %v329 = vmul.f32 %v98, %v326
  %v330 = vmul.f32 %v98, %v328
  %v331 = vadd.f32 %v323, %v329
  %v332 = vadd.f32 %v324, %v330
  %v333 = vrot.slane %v315, 7
  %v334 = vrot.slane %v316, 7
  %v335 = vsel %vm101, %v333, %v334
  %v336 = vsel %vm101, %v334, %v333
  %v337 = vmul.f32 %v117, %v336
  %v338 = vmul.f32 %v122, %v335
  %v339 = vadd.f32 %v331, %v337
  %v340 = vadd.f32 %v332, %v338
  %v341 = vrot.slane %v315, 1
  %v342 = vrot.slane %v316, 1
  %v343 = vsel %vm126, %v341, %v342
  %v344 = vsel %vm126, %v342, %v341
  %v345 = vmul.f32 %v142, %v343
  %v346 = vmul.f32 %v147, %v344
  %v347 = vadd.f32 %v339, %v345
  %v348 = vadd.f32 %v340, %v346
  %v349 = vrot.slane %v299, 6
  %v350 = vrot.slane %v300, 6
  %v351 = vsel %vm151, %v349, %v350
  %v352 = vsel %vm151, %v350, %v349
  %v353 = vmul.f32 %v167, %v352
  %v354 = vmul.f32 %v172, %v351
  %v355 = vadd.f32 %v347, %v353
  %v356 = vadd.f32 %v348, %v354
  %v357 = vrot.slane %v299, 2
  %v358 = vrot.slane %v300, 2
  %v359 = vsel %vm176, %v357, %v358
  %v360 = vsel %vm176, %v358, %v357
  %v361 = vmul.f32 %v192, %v359
  %v362 = vmul.f32 %v197, %v360
  %v363 = vadd.f32 %v355, %v361
  %v364 = vadd.f32 %v356, %v362
  %v365 = vmul.f32 %v363, %v289
  %v366 = vmul.f32 %v364, %v290
  %v367 = vmul.f32 %v295, %v291
  %v368 = vmul.f32 %v296, %v292
  %v369 = vadd.f32 %v365, %v367
  %v370 = vadd.f32 %v366, %v368
  %v371 = vadd.f32 %v369, %v293
  %v372 = vadd.f32 %v370, %v294
  %v373 = vmax.f32 %v371, -1.0
  %v374 = vmax.f32 %v372, -1.0
  %v375 = vmin.f32 %v373, 1.0
  %v376 = vmin.f32 %v374, 1.0
  %377 = vst [vmem:[%s3] sm:$0xff] %v375
  %378 = vst [vmem:[%s3 + $0x8] sm:$0xff] %v376
  %s379 = scalar_lea.vmem %s0, 16
  %v380 = vld [vmem:[%s379] sm:$0xff]
  %v381 = vld [vmem:[%s379 + $0x8] sm:$0xff]
  %v382 = vadd.f32 %v380, 1.0
  %v383 = vadd.f32 %v381, 1.0
  %v384 = vmul.f32 %v382, %v22
  %v385 = vmul.f32 %v383, %v23
  %386 = vrot.lane.b32.xlu0 %v384, 1
  %v387 = vpop.permute.xlu0 %386
  %388 = vrot.lane.b32.xlu0 %v385, 1
  %v389 = vpop.permute.xlu0 %388
  %v390 = vmul.f32 %v50, %v387
  %v391 = vmul.f32 %v50, %v389
  %v392 = vadd.f32 %v384, %v390
  %v393 = vadd.f32 %v385, %v391
  %394 = vrot.lane.b32.xlu0 %v384, 127
  %v395 = vpop.permute.xlu0 %394
  %396 = vrot.lane.b32.xlu0 %v385, 127
  %v397 = vpop.permute.xlu0 %396
  %v398 = vmul.f32 %v66, %v395
  %v399 = vmul.f32 %v66, %v397
  %v400 = vadd.f32 %v392, %v398
  %v401 = vadd.f32 %v393, %v399
  %402 = vrot.lane.b32.xlu0 %v384, 2
  %v403 = vpop.permute.xlu0 %402
  %404 = vrot.lane.b32.xlu0 %v385, 2
  %v405 = vpop.permute.xlu0 %404
  %v406 = vmul.f32 %v82, %v403
  %v407 = vmul.f32 %v82, %v405
  %v408 = vadd.f32 %v400, %v406
  %v409 = vadd.f32 %v401, %v407
  %410 = vrot.lane.b32.xlu0 %v384, 126
  %v411 = vpop.permute.xlu0 %410
  %412 = vrot.lane.b32.xlu0 %v385, 126
  %v413 = vpop.permute.xlu0 %412
  %v414 = vmul.f32 %v98, %v411
  %v415 = vmul.f32 %v98, %v413
  %v416 = vadd.f32 %v408, %v414
  %v417 = vadd.f32 %v409, %v415
  %v418 = vrot.slane %v400, 7
  %v419 = vrot.slane %v401, 7
  %v420 = vsel %vm101, %v418, %v419
  %v421 = vsel %vm101, %v419, %v418
  %v422 = vmul.f32 %v117, %v421
  %v423 = vmul.f32 %v122, %v420
  %v424 = vadd.f32 %v416, %v422
  %v425 = vadd.f32 %v417, %v423
  %v426 = vrot.slane %v400, 1
  %v427 = vrot.slane %v401, 1
  %v428 = vsel %vm126, %v426, %v427
  %v429 = vsel %vm126, %v427, %v426
  %v430 = vmul.f32 %v142, %v428
  %v431 = vmul.f32 %v147, %v429
  %v432 = vadd.f32 %v424, %v430
  %v433 = vadd.f32 %v425, %v431
  %v434 = vrot.slane %v384, 6
  %v435 = vrot.slane %v385, 6
  %v436 = vsel %vm151, %v434, %v435
  %v437 = vsel %vm151, %v435, %v434
  %v438 = vmul.f32 %v167, %v437
  %v439 = vmul.f32 %v172, %v436
  %v440 = vadd.f32 %v432, %v438
  %v441 = vadd.f32 %v433, %v439
  %v442 = vrot.slane %v384, 2
  %v443 = vrot.slane %v385, 2
  %v444 = vsel %vm176, %v442, %v443
  %v445 = vsel %vm176, %v443, %v442
  %v446 = vmul.f32 %v192, %v444
  %v447 = vmul.f32 %v197, %v445
  %v448 = vadd.f32 %v440, %v446
  %v449 = vadd.f32 %v441, %v447
  %v450 = vmul.f32 %v448, %v289
  %v451 = vmul.f32 %v449, %v290
  %v452 = vmul.f32 %v380, %v291
  %v453 = vmul.f32 %v381, %v292
  %v454 = vadd.f32 %v450, %v452
  %v455 = vadd.f32 %v451, %v453
  %v456 = vadd.f32 %v454, %v293
  %v457 = vadd.f32 %v455, %v294
  %v458 = vmax.f32 %v456, -1.0
  %v459 = vmax.f32 %v457, -1.0
  %v460 = vmin.f32 %v458, 1.0
  %v461 = vmin.f32 %v459, 1.0
  %s462 = scalar_lea.vmem %s3, 16
  %463 = vst [vmem:[%s462] sm:$0xff] %v460
  %464 = vst [vmem:[%s462 + $0x8] sm:$0xff] %v461
  %s465 = scalar_lea.vmem %s0, 32
  %v466 = vld [vmem:[%s465] sm:$0xff]
  %v467 = vld [vmem:[%s465 + $0x8] sm:$0xff]
  %v468 = vadd.f32 %v466, 1.0
  %v469 = vadd.f32 %v467, 1.0
  %v470 = vmul.f32 %v468, %v22
  %v471 = vmul.f32 %v469, %v23
  %472 = vrot.lane.b32.xlu0 %v470, 1
  %v473 = vpop.permute.xlu0 %472
  %474 = vrot.lane.b32.xlu0 %v471, 1
  %v475 = vpop.permute.xlu0 %474
  %v476 = vmul.f32 %v50, %v473
  %v477 = vmul.f32 %v50, %v475
  %v478 = vadd.f32 %v470, %v476
  %v479 = vadd.f32 %v471, %v477
  %480 = vrot.lane.b32.xlu0 %v470, 127
  %v481 = vpop.permute.xlu0 %480
  %482 = vrot.lane.b32.xlu0 %v471, 127
  %v483 = vpop.permute.xlu0 %482
  %v484 = vmul.f32 %v66, %v481
  %v485 = vmul.f32 %v66, %v483
  %v486 = vadd.f32 %v478, %v484
  %v487 = vadd.f32 %v479, %v485
  %488 = vrot.lane.b32.xlu0 %v470, 2
  %v489 = vpop.permute.xlu0 %488
  %490 = vrot.lane.b32.xlu0 %v471, 2
  %v491 = vpop.permute.xlu0 %490
  %v492 = vmul.f32 %v82, %v489
  %v493 = vmul.f32 %v82, %v491
  %v494 = vadd.f32 %v486, %v492
  %v495 = vadd.f32 %v487, %v493
  %496 = vrot.lane.b32.xlu0 %v470, 126
  %v497 = vpop.permute.xlu0 %496
  %498 = vrot.lane.b32.xlu0 %v471, 126
  %v499 = vpop.permute.xlu0 %498
  %v500 = vmul.f32 %v98, %v497
  %v501 = vmul.f32 %v98, %v499
  %v502 = vadd.f32 %v494, %v500
  %v503 = vadd.f32 %v495, %v501
  %v504 = vrot.slane %v486, 7
  %v505 = vrot.slane %v487, 7
  %v506 = vsel %vm101, %v504, %v505
  %v507 = vsel %vm101, %v505, %v504
  %v508 = vmul.f32 %v117, %v507
  %v509 = vmul.f32 %v122, %v506
  %v510 = vadd.f32 %v502, %v508
  %v511 = vadd.f32 %v503, %v509
  %v512 = vrot.slane %v486, 1
  %v513 = vrot.slane %v487, 1
  %v514 = vsel %vm126, %v512, %v513
  %v515 = vsel %vm126, %v513, %v512
  %v516 = vmul.f32 %v142, %v514
  %v517 = vmul.f32 %v147, %v515
  %v518 = vadd.f32 %v510, %v516
  %v519 = vadd.f32 %v511, %v517
  %v520 = vrot.slane %v470, 6
  %v521 = vrot.slane %v471, 6
  %v522 = vsel %vm151, %v520, %v521
  %v523 = vsel %vm151, %v521, %v520
  %v524 = vmul.f32 %v167, %v523
  %v525 = vmul.f32 %v172, %v522
  %v526 = vadd.f32 %v518, %v524
  %v527 = vadd.f32 %v519, %v525
  %v528 = vrot.slane %v470, 2
  %v529 = vrot.slane %v471, 2
  %v530 = vsel %vm176, %v528, %v529
  %v531 = vsel %vm176, %v529, %v528
  %v532 = vmul.f32 %v192, %v530
  %v533 = vmul.f32 %v197, %v531
  %v534 = vadd.f32 %v526, %v532
  %v535 = vadd.f32 %v527, %v533
  %v536 = vmul.f32 %v534, %v289
  %v537 = vmul.f32 %v535, %v290
  %v538 = vmul.f32 %v466, %v291
  %v539 = vmul.f32 %v467, %v292
  %v540 = vadd.f32 %v536, %v538
  %v541 = vadd.f32 %v537, %v539
  %v542 = vadd.f32 %v540, %v293
  %v543 = vadd.f32 %v541, %v294
  %v544 = vmax.f32 %v542, -1.0
  %v545 = vmax.f32 %v543, -1.0
  %v546 = vmin.f32 %v544, 1.0
  %v547 = vmin.f32 %v545, 1.0
  %s548 = scalar_lea.vmem %s3, 32
  %549 = vst [vmem:[%s548] sm:$0xff] %v546
  %550 = vst [vmem:[%s548 + $0x8] sm:$0xff] %v547
  // Predicated region
  $region14: #{forward.1} parent=0 // pred_check
    _
  $region15: #{forward.1} parent=0 // pred_check_branch
    %552 = sbr.rel (0) target = $region17
  $region16: #{forward.1} parent=0 // pred_region
    _
  $region17: #{forward.1} parent=0 // pred_fallthru
    _
  // Predicated region
  $region18: #{forward.1} parent=0 // pred_check
    _
  $region19: #{forward.1} parent=0 // pred_check_branch
    %554 = sbr.rel (0) target = $region21
  $region20: #{forward.1} parent=0 // pred_region
    _
  $region21: #{forward.1} parent=0 // pred_fallthru
    _

</llo_original>
